<compile_context>
chip_gen: v6e
topology: v6e:2x2x1
jax: 0.10.0
libtpu: 0.0.40
codegen_flags: <defaults>
</compile_context>

<pallas_src>
import math

import jax
import jax.numpy as jnp
from jax.experimental import pallas as pl
from jax.experimental.pallas import tpu as pltpu


def _round_up(x, m):
    return (x + m - 1) // m * m


def _make_ngcn_kernel(nk, compute_dtype):
    """Kernel for one (dst-tile i, out-tile j, k-tile k) grid step.

    a_ref  : (TM, TK)  relation-folded adjacency tile (int8 counts or f32)
    hw_ref : (TK, TN)  precomputed (H @ W_r) rows for this k-tile (compute dtype)
    b_ref  : (1,  TN)  bias tile (f32)
    o_ref  : (TM, TN)  f32 output tile; resident across k => used as accumulator

    `nk` (static k-extent) is closed over so the first/last-k cases specialize at
    trace time: no zero-init pass, and bias+ReLU folds into the last-k store.
    """

    def kernel(a_ref, hw_ref, b_ref, o_ref):
        k = pl.program_id(2)
        # int8 -> bf16/f32 cast rides the VPU; MXU sees the compute dtype.
        a = a_ref[...].astype(compute_dtype)
        partial = jnp.dot(a, hw_ref[...], preferred_element_type=jnp.float32)

        if nk == 1:
            o_ref[...] = jnp.maximum(partial + b_ref[...], 0.0)
        else:
            @pl.when(k == 0)
            def _():
                o_ref[...] = partial            # init with first partial product

            @pl.when(jnp.logical_and(k > 0, k < nk - 1))
            def _():
                o_ref[...] += partial

            @pl.when(k == nk - 1)
            def _():
                # bias + ReLU folded into the final accumulate/store.
                o_ref[...] = jnp.maximum(o_ref[...] + partial + b_ref[...], 0.0)

    return kernel


def ngcn_layer(h, src, dst, rel_type, weight, bias, *,
               compute_dtype=jnp.bfloat16,
               a_dtype=jnp.int8,
               tm_max=512, tk_max=2048, tn_max=1024):
    """Pallas-backed NGCNLayer forward.

    h        : [N, in_feat] float32 node features
    src, dst : [E] int32 edge endpoints
    rel_type : [E] int32 relation id per edge
    weight   : [num_rels, in_feat, out_feat]
    bias     : [out_feat]
    returns  : [N, out_feat] = relu(sum-aggregated messages + bias)

    Precision notes:
      * a_dtype=int8 is exact for per-(dst, rel, src) edge multiplicity <= 127
        (typical graphs are simple, multiplicity 1). Pass a_dtype=jnp.float32 for
        heavy multigraphs.
      * compute_dtype=bf16 quantizes the messages (H @ W_r) to ~1e-2 relative
        error vs the f32 PyTorch reference; pass jnp.float32 for exactness.
    """
    N, in_feat = h.shape
    num_rels, _, out_feat = weight.shape
    K = num_rels * N

    # ---- tile sizes ----------------------------------------------------------
    # Sublane alignment: 32 covers int8 packing (and f32/bf16 a fortiori).
    TM = min(tm_max, _round_up(N, 32))
    if _round_up(N, TM) // TM < 2 and TM >= 64:
        # v7x megacore: once the j axis collapses to one tile, keep >=2 dst tiles
        # so both TensorCores get work (harmless ~0.35us extra step elsewhere).
        TM = _round_up((TM + 1) // 2, 32)
    N_pad = _round_up(N, TM)

    TK = min(tk_max, _round_up(K, 128))
    K_pad = _round_up(K, TK)

    OUT_pad = _round_up(out_feat, 128)           # lane-dense output stores
    TN = min(tn_max, OUT_pad)                    # full output width when it fits:
    OUT_pad = _round_up(OUT_pad, TN)             # j extent 1 => A streamed once

    # ---- glue (plain XLA): graph prep + the small H @ W_r GEMM ---------------
    # Relation-folded incoming adjacency built DIRECTLY in the streamed dtype
    # (no f32 slab + cast pass over the N_pad x K_pad array).
    a_cat = (jnp.zeros((N_pad, K_pad), a_dtype)
             .at[dst, rel_type * N + src]
             .add(jnp.ones(src.shape, a_dtype)))

    # HW[r*N + u, :] = (H @ W_r)[u, :], computed once (not per dst tile).
    hw = jnp.einsum("uf,rfo->ruo",
                    h.astype(jnp.float32),
                    weight.astype(jnp.float32)).reshape(K, out_feat)
    hw = jnp.zeros((K_pad, OUT_pad), jnp.float32).at[:K, :out_feat].set(hw)
    hw = hw.astype(compute_dtype)

    bias_p = jnp.zeros((1, OUT_pad), jnp.float32).at[0, :out_feat].set(
        bias.astype(jnp.float32))

    grid = (N_pad // TM, OUT_pad // TN, K_pad // TK)
    nk = grid[2]

    # ---- VMEM budget: double-buffered A + HW, resident f32 output, bias ------
    est_vmem = (2 * TM * TK * jnp.dtype(a_dtype).itemsize
                + 2 * TK * TN * jnp.dtype(compute_dtype).itemsize
                + 2 * TM * TN * 4
                + 2 * TN * 4)
    # Cap at 48 MiB so the same config is safe on v7x (64 MiB physical VMEM) as
    # well as v5e/v6e (128 MiB); floor at 32 MiB to lift v5e's 16 MiB default.
    vmem_limit = min(max(est_vmem + (8 << 20), 32 << 20), 48 << 20)

    out = pl.pallas_call(
        _make_ngcn_kernel(nk, compute_dtype),
        out_shape=jax.ShapeDtypeStruct((N_pad, OUT_pad), jnp.float32),
        grid_spec=pltpu.PrefetchScalarGridSpec(
            num_scalar_prefetch=0,
            grid=grid,
            in_specs=[
                # Adjacency tile (i, k): with j collapsed, streamed exactly once.
                # TODO(synk): add pipeline_mode=pl.Buffered(3) here if profiling
                # shows exposed DMA waits at the chosen tile size.
                pl.BlockSpec((TM, TK), lambda i, j, k: (i, k)),
                pl.BlockSpec((TK, TN), lambda i, j, k: (k, j)),   # H @ W rows
                pl.BlockSpec((1, TN), lambda i, j, k: (0, j)),    # bias
            ],
            out_specs=pl.BlockSpec((TM, TN), lambda i, j, k: (i, j)),
        ),
        compiler_params=pltpu.CompilerParams(
            # dst/out tiles parallel (v7x megacore), K axis is the reduction.
            dimension_semantics=("parallel", "parallel", "arbitrary"),
            vmem_limit_bytes=int(vmem_limit),
        ),
    )(a_cat, hw, bias_p)

    # Padded rows hold relu(bias) and padded cols hold 0; both sliced off here.
    return out[:N, :out_feat].astype(h.dtype)


def xavier_uniform_relu(key, shape):
    """torch.nn.init.xavier_uniform_ with gain=calculate_gain('relu')=sqrt(2)."""
    num_rels, in_feat, out_feat = shape
    receptive = out_feat                      # PyTorch fan calc for >2D tensors
    fan_in = in_feat * receptive
    fan_out = num_rels * receptive
    gain = math.sqrt(2.0)
    bound = gain * math.sqrt(6.0 / (fan_in + fan_out))
    return jax.random.uniform(key, shape, jnp.float32, minval=-bound, maxval=bound)


if __name__ == "__main__":
    key = jax.random.PRNGKey(0)
    k_h, k_w, k_src, k_dst, k_rel = jax.random.split(key, 5)

    # Small synthetic graph / layer config.
    N = 16          # number of nodes
    E = 40          # number of edges
    in_feat = 32
    out_feat = 32
    num_rels = 4

    h = jax.random.normal(k_h, (N, in_feat), jnp.float32)
    src = jax.random.randint(k_src, (E,), 0, N, jnp.int32)
    dst = jax.random.randint(k_dst, (E,), 0, N, jnp.int32)
    rel_type = jax.random.randint(k_rel, (E,), 0, num_rels, jnp.int32)

    weight = xavier_uniform_relu(k_w, (num_rels, in_feat, out_feat))
    bias = jnp.zeros((out_feat,), jnp.float32)     # nn.init.zeros_

    # Pure-JAX reference (per-edge gather / bmm / scatter-sum, bias, relu).
    msg = jnp.einsum("ef,efo->eo", h[src], weight[rel_type])
    agg = jnp.zeros((N, out_feat), jnp.float32).at[dst].add(msg)
    ref = jnp.maximum(agg + bias[None, :], 0.0)

    # Full-f32 path: must match the reference tightly.
    out_f32 = jax.block_until_ready(
        ngcn_layer(h, src, dst, rel_type, weight, bias,
                   compute_dtype=jnp.float32, a_dtype=jnp.float32))
    assert out_f32.shape == (N, out_feat)
    assert jnp.allclose(out_f32, ref, atol=1e-4, rtol=1e-4), "f32 mismatch vs reference"

    # Default path: int8 adjacency stream + bf16 HW stream, f32 accumulation.
    out_fast = jax.block_until_ready(
        ngcn_layer(h, src, dst, rel_type, weight, bias))
    assert out_fast.shape == (N, out_feat)
    assert jnp.allclose(out_fast, ref, atol=2e-2, rtol=2e-2), "int8/bf16 mismatch vs reference"

    print("KERNEL_OK")
</pallas_src>

<mosaic_0001>
module attributes {stable_mosaic.version = 11 : i64} {
  func.func @kernel(%arg0: i32, %arg1: i32, %arg2: i32, %arg3: memref<32x128xf32, #tpu.memory_space<vmem>>, %arg4: memref<128x128xf32, #tpu.memory_space<vmem>>, %arg5: memref<1x128xf32, #tpu.memory_space<vmem>>, %arg6: memref<32x128xf32, #tpu.memory_space<vmem>>) attributes {dimension_semantics = [#tpu.dimension_semantics<parallel>, #tpu.dimension_semantics<parallel>, #tpu.dimension_semantics<arbitrary>], iteration_bounds = array<i64: 1, 1, 1>, scalar_prefetch = 0 : i64, scratch_operands = 0 : i64, tpu.core_type = #tpu.core_type<tc>, window_params = [{transform_indices = @transform_0, window_bounds = array<i64: 32, 128>}, {transform_indices = @transform_1, window_bounds = array<i64: 128, 128>}, {transform_indices = @transform_2, window_bounds = array<i64: 1, 128>}, {transform_indices = @transform_3, window_bounds = array<i64: 32, 128>}]} {
    %c0 = arith.constant 0 : index
    %c0_0 = arith.constant 0 : index
    %0 = vector.load %arg3[%c0, %c0_0] : memref<32x128xf32, #tpu.memory_space<vmem>>, vector<32x128xf32>
    %c0_1 = arith.constant 0 : index
    %c0_2 = arith.constant 0 : index
    %1 = vector.load %arg4[%c0_1, %c0_2] : memref<128x128xf32, #tpu.memory_space<vmem>>, vector<128x128xf32>
    %cst = arith.constant dense<0.000000e+00> : vector<32x128xf32>
    %2 = tpu.matmul %0, %1, %cst {dimension_numbers = #tpu.dot_dimension_numbers<[1], [0], [0], [1], [0, 0, 1, 1], [], []>} : vector<32x128xf32>, vector<128x128xf32>, vector<32x128xf32> -> vector<32x128xf32>
    %c0_3 = arith.constant 0 : index
    %c0_4 = arith.constant 0 : index
    %3 = vector.load %arg5[%c0_3, %c0_4] : memref<1x128xf32, #tpu.memory_space<vmem>>, vector<1x128xf32>
    %4 = vector.broadcast %3 : vector<1x128xf32> to vector<32x128xf32>
    %5 = arith.addf %2, %4 : vector<32x128xf32>
    %cst_5 = arith.constant 0.000000e+00 : f32
    %6 = vector.broadcast %cst_5 : f32 to vector<32x128xf32>
    %7 = arith.maximumf %5, %6 : vector<32x128xf32>
    %c0_6 = arith.constant 0 : index
    %c0_7 = arith.constant 0 : index
    %8 = vector.load %arg6[%c0_6, %c0_7] : memref<32x128xf32, #tpu.memory_space<vmem>>, vector<32x128xf32>
    tpu.vector_store %arg6[%c0_6, %c0_7], %7 {strides = array<i32>} : memref<32x128xf32, #tpu.memory_space<vmem>>, vector<32x128xf32>,
    return
  }
  func.func @transform_0(%arg0: i32, %arg1: i32, %arg2: i32) -> (i32, i32) {
    %c0_i32 = arith.constant 0 : i32
    return %arg0, %arg2 : i32, i32
  }
  func.func @transform_1(%arg0: i32, %arg1: i32, %arg2: i32) -> (i32, i32) {
    %c0_i32 = arith.constant 0 : i32
    return %arg2, %arg1 : i32, i32
  }
  func.func @transform_2(%arg0: i32, %arg1: i32, %arg2: i32) -> (i32, i32) {
    %c0_i32 = arith.constant 0 : i32
    %c0_i32_0 = arith.constant 0 : i32
    return %c0_i32, %arg1 : i32, i32
  }
  func.func @transform_3(%arg0: i32, %arg1: i32, %arg2: i32) -> (i32, i32) {
    %c0_i32 = arith.constant 0 : i32
    return %arg0, %arg1 : i32, i32
  }
}

</mosaic_0001>

<llo_original>
// kernel: tpu_custom_call.1
$region0: #{tpu_custom_call.1}
  #allocation0 [shape = 'u32[]', space=smem, size = 0x4, offset = 0x4, fixed_abs, tag = 'smem constant byte address 0x4 - core index']
  #allocation1 [shape = 'u32[144,128]{1,0:T(1,128)}', space=vmem, size = 0x12000, scoped, tag = 'internal scratch']
  %s0 = inlined_call_operand.hbm [shape: f32[32,128], index: 0, kind: input, shape index: {}]
  %s1 = inlined_call_operand.hbm [shape: f32[128,128], index: 1, kind: input, shape index: {}]
  %s2 = inlined_call_operand.vmem [shape: f32[1,128], index: 2, kind: input, shape index: {}]
  %s3 = inlined_call_operand.hbm [shape: f32[32,128], index: 3, kind: output, shape index: {}]
  %s4 = sld [smem:[#allocation0]]
  $region30: #{tpu_custom_call.1} parent=0
    _
  %s6 = ssub.s32 1, %s4
  %s7 = scalar_select 0, %s6, %s4
  $region1: #{tpu_custom_call.1} parent=0
    #allocation2 [shape = 'u8[16384]{0}', space=vmem, size = 0x4000, scoped, tag = 'input window, operand 0, single buffered']
    #allocation3 [shape = 's32[1]{0}', space=sflag, size = 0x4, scoped, tag = 'scoped memory for tpu_custom_call.1']
    #allocation4 [shape = 's32[1]{0}', space=sflag, size = 0x4, scoped, tag = 'scoped memory for tpu_custom_call.1']
    #allocation5 [shape = 'u8[65536]{0}', space=vmem, size = 0x10000, scoped, tag = 'input window, operand 1, single buffered']
    #allocation6 [shape = 's32[1]{0}', space=sflag, size = 0x4, scoped, tag = 'scoped memory for tpu_custom_call.1']
    #allocation7 [shape = 'u8[16384]{0}', space=vmem, size = 0x4000, scoped, tag = 'output window, operand 0, single buffered']
    %8 = vsyncpa [#allocation3], 0
    %9 = vsyncpa [#allocation6], 0
    %10 = vsyncpa [#allocation4], 0
    // Predicated region
    $region2: #{tpu_custom_call.1} parent=1 // pred_check
      _
    $region3: #{tpu_custom_call.1} parent=1 // pred_check_branch
      %12 = sbr.rel (0) target = $region5
    $region4: #{tpu_custom_call.1} parent=1 // pred_region
      %s14 = ssub.s32 512, 512
      %15 = vsyncadd [#allocation3], %s14
      %s16 = sshll.u32 [#allocation2], 4
      %s17 = int_to_ptr.vmem [resolvable:$true] %s16
      %22 = dma.hbm_to_vmem [thread:$0]  %s0, 512, %s17, [#allocation3], 128, 128, 8
    $region5: #{tpu_custom_call.1} parent=1 // pred_fallthru
      _
    // Predicated region
    $region6: #{tpu_custom_call.1} parent=1 // pred_check
      _
    $region7: #{tpu_custom_call.1} parent=1 // pred_check_branch
      %24 = sbr.rel (0) target = $region9
    $region8: #{tpu_custom_call.1} parent=1 // pred_region
      %s26 = ssub.s32 2048, 2048
      %27 = vsyncadd [#allocation6], %s26
      %s28 = sshll.u32 [#allocation5], 4
      %s29 = int_to_ptr.vmem [resolvable:$true] %s28
      %34 = dma.hbm_to_vmem [thread:$0]  %s1, 2048, %s29, [#allocation6], 128, 128, 8
    $region9: #{tpu_custom_call.1} parent=1 // pred_fallthru
      _
    // Predicated region
    $region10: #{tpu_custom_call.1} parent=1 // pred_check
      _
    $region11: #{tpu_custom_call.1} parent=1 // pred_check_branch
      %36 = sbr.rel (0) target = $region13
    $region12: #{tpu_custom_call.1} parent=1 // pred_region
      _
    $region13: #{tpu_custom_call.1} parent=1 // pred_fallthru
      _
    // Predicated region
    $region14: #{tpu_custom_call.1} parent=1 // pred_check
      _
    $region15: #{tpu_custom_call.1} parent=1 // pred_check_branch
      %38 = sbr.rel (0) target = $region17
    $region16: #{tpu_custom_call.1} parent=1 // pred_region
      %39 = dma.done [#allocation3], 512
    $region17: #{tpu_custom_call.1} parent=1 // pred_fallthru
      _
    // Predicated region
    $region18: #{tpu_custom_call.1} parent=1 // pred_check
      _
    $region19: #{tpu_custom_call.1} parent=1 // pred_check_branch
      %41 = sbr.rel (0) target = $region21
    $region20: #{tpu_custom_call.1} parent=1 // pred_region
      %42 = dma.done [#allocation6], 2048
    $region21: #{tpu_custom_call.1} parent=1 // pred_fallthru
      _
    %v43 = vld [vmem:[#allocation2] sm:$0xff]
    %v44 = vld [vmem:[#allocation2 + $0x8] sm:$0xff]
    %v45 = vld [vmem:[#allocation2 + $0x10] sm:$0xff]
    %v46 = vld [vmem:[#allocation2 + $0x18] sm:$0xff]
    %v47 = vld [vmem:[#allocation5] sm:$0xff]
    %v48 = vld [vmem:[#allocation5 + $0x8] sm:$0xff]
    %v49 = vld [vmem:[#allocation5 + $0x10] sm:$0xff]
    %v50 = vld [vmem:[#allocation5 + $0x18] sm:$0xff]
    %v51 = vld [vmem:[#allocation5 + $0x20] sm:$0xff]
    %v52 = vld [vmem:[#allocation5 + $0x28] sm:$0xff]
    %v53 = vld [vmem:[#allocation5 + $0x30] sm:$0xff]
    %v54 = vld [vmem:[#allocation5 + $0x38] sm:$0xff]
    %v55 = vld [vmem:[#allocation5 + $0x40] sm:$0xff]
    %v56 = vld [vmem:[#allocation5 + $0x48] sm:$0xff]
    %v57 = vld [vmem:[#allocation5 + $0x50] sm:$0xff]
    %v58 = vld [vmem:[#allocation5 + $0x58] sm:$0xff]
    %v59 = vld [vmem:[#allocation5 + $0x60] sm:$0xff]
    %v60 = vld [vmem:[#allocation5 + $0x68] sm:$0xff]
    %v61 = vld [vmem:[#allocation5 + $0x70] sm:$0xff]
    %v62 = vld [vmem:[#allocation5 + $0x78] sm:$0xff]
    %v63 = vld [vmem:[%s2] sm:$0x1]
    %v65 = vlaneseq
    %v66 = vshrl.u32 %v65, 7
    %v67 = vsub.s32 0, %v66
    %v68 = vrot.slane %v63, %v67
    %70 = vmatprep.subr.mxu0 0.0
    %71 = vmatpush1.msra.mxu0 %v62
    %72 = vmatprep.subr.mxu0 0.0
    %73 = vmatpush1.msra.mxu0 %v61
    %74 = vmatprep.subr.mxu0 0.0
    %75 = vmatpush1.msra.mxu0 %v60
    %76 = vmatprep.subr.mxu0 0.0
    %77 = vmatpush1.msra.mxu0 %v59
    %78 = vmatprep.subr.mxu0 0.0
    %79 = vmatpush1.msra.mxu0 %v58
    %80 = vmatprep.subr.mxu0 0.0
    %81 = vmatpush1.msra.mxu0 %v57
    %82 = vmatprep.subr.mxu0 0.0
    %83 = vmatpush1.msra.mxu0 %v56
    %84 = vmatprep.subr.mxu0 0.0
    %85 = vmatpush1.msra.mxu0 %v55
    %86 = vmatprep.subr.mxu0 0.0
    %87 = vmatpush1.msra.mxu0 %v54
    %88 = vmatprep.subr.mxu0 0.0
    %89 = vmatpush1.msra.mxu0 %v53
    %90 = vmatprep.subr.mxu0 0.0
    %91 = vmatpush1.msra.mxu0 %v52
    %92 = vmatprep.subr.mxu0 0.0
    %93 = vmatpush1.msra.mxu0 %v51
    %94 = vmatprep.subr.mxu0 0.0
    %95 = vmatpush1.msra.mxu0 %v50
    %96 = vmatprep.subr.mxu0 0.0
    %97 = vmatpush1.msra.mxu0 %v49
    %98 = vmatprep.subr.mxu0 0.0
    %99 = vmatpush1.msra.mxu0 %v48
    %100 = vmatprep.subr.mxu0 0.0
    %101 = vmatpush1.msra.mxu0 %v47
    %102 = vmatprep.subr.mxu0 0.0
    %103 = vmatpush2.msra.mxu0 0.0
    %104 = vmatprep.subr.mxu0 0.0
    %105 = vmatpush2.msra.mxu0 0.0
    %106 = vmatprep.subr.mxu0 0.0
    %107 = vmatpush2.msra.mxu0 0.0
    %108 = vmatprep.subr.mxu0 0.0
    %109 = vmatpush2.msra.mxu0 0.0
    %110 = vmatprep.subr.mxu0 0.0
    %111 = vmatpush2.msra.mxu0 0.0
    %112 = vmatprep.subr.mxu0 0.0
    %113 = vmatpush2.msra.mxu0 0.0
    %114 = vmatprep.subr.mxu0 0.0
    %115 = vmatpush2.msra.mxu0 0.0
    %116 = vmatprep.subr.mxu0 0.0
    %117 = vmatpush2.msra.mxu0 0.0
    %118 = vmatprep.subr.mxu0 0.0
    %119 = vmatpush2.msra.mxu0 0.0
    %120 = vmatprep.subr.mxu0 0.0
    %121 = vmatpush2.msra.mxu0 0.0
    %122 = vmatprep.subr.mxu0 0.0
    %123 = vmatpush2.msra.mxu0 0.0
    %124 = vmatprep.subr.mxu0 0.0
    %125 = vmatpush2.msra.mxu0 0.0
    %126 = vmatprep.subr.mxu0 0.0
    %127 = vmatpush2.msra.mxu0 0.0
    %128 = vmatprep.subr.mxu0 0.0
    %129 = vmatpush2.msra.mxu0 0.0
    %130 = vmatprep.subr.mxu0 0.0
    %131 = vmatpush2.msra.mxu0 0.0
    %132 = vmatprep.subr.mxu0 0.0
    %133 = vmatpush2.msra.mxu0 0.0
    %134 = vmatprep.mubr.f32.mxu0 0.0
    %135 = vmatmul.mubr.f32.gmra.mxu0 %v43
    %v136 = vpop.f32.mrf.mxu0
    %v137 = vadd.f32 %v68, %v136
    %v138 = vpop.f32.mrf.mxu0
    %139 = vmatprep.mubr.f32.mxu0 0.0
    %140 = vmatmul.mubr.f32.gmra.mxu0 %v44
    %v141 = vpop.f32.mrf.mxu0
    %v142 = vadd.f32 %v68, %v141
    %v143 = vpop.f32.mrf.mxu0
    %144 = vmatprep.mubr.f32.mxu0 0.0
    %145 = vmatmul.mubr.f32.gmra.mxu0 %v45
    %v146 = vpop.f32.mrf.mxu0
    %v147 = vadd.f32 %v68, %v146
    %v148 = vpop.f32.mrf.mxu0
    %149 = vmatprep.mubr.f32.mxu0 0.0
    %150 = vmatmul.mubr.f32.gmra.mxu0 %v46
    %v151 = vpop.f32.mrf.mxu0
    %v152 = vadd.f32 %v68, %v151
    %v153 = vpop.f32.mrf.mxu0
    %154 = vdwg.mxu0
    %v155 = vmax.f32 %v137, 0.0
    %v156 = vmax.f32 %v142, 0.0
    %v157 = vmax.f32 %v147, 0.0
    %v158 = vmax.f32 %v152, 0.0
    %159 = vst [vmem:[#allocation7] sm:$0xff] %v155
    %160 = vst [vmem:[#allocation7 + $0x8] sm:$0xff] %v156
    %161 = vst [vmem:[#allocation7 + $0x10] sm:$0xff] %v157
    %162 = vst [vmem:[#allocation7 + $0x18] sm:$0xff] %v158
    // Predicated region
    $region22: #{tpu_custom_call.1} parent=1 // pred_check
      _
    $region23: #{tpu_custom_call.1} parent=1 // pred_check_branch
      %164 = sbr.rel (0) target = $region25
    $region24: #{tpu_custom_call.1} parent=1 // pred_region
      %s166 = ssub.s32 512, 512
      %167 = vsyncadd [#allocation4], %s166
      %s168 = sshll.u32 [#allocation7], 4
      %s169 = int_to_ptr.vmem [resolvable:$true] %s168
      %174 = dma.vmem_to_hbm [thread:$0]  %s169, 512, %s3, [#allocation4], 128, 128, 8
    $region25: #{tpu_custom_call.1} parent=1 // pred_fallthru
      _
    // Predicated region
    $region26: #{tpu_custom_call.1} parent=1 // pred_check
      _
    $region27: #{tpu_custom_call.1} parent=1 // pred_check_branch
      %176 = sbr.rel (0) target = $region29
    $region28: #{tpu_custom_call.1} parent=1 // pred_region
      %177 = dma.done [#allocation4], 512
    $region29: #{tpu_custom_call.1} parent=1 // pred_fallthru
      _
    %178 = vsyncpa [#allocation3], 1
    %179 = vsyncpa [#allocation6], 1
    %180 = vsyncpa [#allocation4], 1

</llo_original>
